<compile_context>
chip_gen: v7x
topology: tpu7x:2x2x1
jax: 0.10.0
libtpu: 0.0.40
codegen_flags: <defaults>
</compile_context>

<pallas_src>
import functools

import jax
import jax.numpy as jnp
from jax import lax
from jax.experimental import pallas as pl
from jax.experimental.pallas import tpu as pltpu


def _embed_dropout_kernel(seed_ref, ids_ref, table_ref, out_ref, *, rate, training):
    """One token-tile: one-hot MXU gather from the resident table + fused dropout."""
    T, D = out_ref.shape
    V = table_ref.shape[0]

    ids = ids_ref[...]                                   # (T, 1) int32
    table = table_ref[...]                               # (V, D)

    # Embedding gather as a one-hot matmul (table is VMEM-resident).
    onehot = (ids == lax.broadcasted_iota(jnp.int32, (T, V), 1)).astype(table.dtype)
    emb = jnp.dot(onehot, table, preferred_element_type=jnp.float32)  # (T, D) f32

    if training and rate > 0.0:
        # Counter-based PRNG: murmur3 fmix32 over a global per-element counter.
        # Portable (TPU + interpret mode) and deterministic per seed.
        row = lax.broadcasted_iota(jnp.int32, (T, D), 0)
        col = lax.broadcasted_iota(jnp.int32, (T, D), 1)
        base = pl.program_id(0) * (T * D) + seed_ref[0] * (-1640531535)  # 0x9E3779B1
        x = base + row * D + col
        x = x ^ lax.shift_right_logical(x, 16)
        x = x * (-2048144789)                            # 0x85EBCA6B as signed i32
        x = x ^ lax.shift_right_logical(x, 13)
        x = x * (-1028477387)                            # 0xC2B2AE35 as signed i32
        x = x ^ lax.shift_right_logical(x, 16)
        u16 = lax.shift_right_logical(x, 8) & 0xFFFF     # 16 uniform bits in [0, 65536)
        thresh = jnp.int32(int(round(rate * 65536.0)))
        keep = u16 >= thresh                             # P(keep) = 1 - rate
        inv_keep = jnp.float32(1.0 / (1.0 - rate))
        out_ref[...] = jnp.where(keep, emb * inv_keep, 0.0).astype(out_ref.dtype)
    else:
        out_ref[...] = emb.astype(out_ref.dtype)


def _round_up(x, m):
    return ((x + m - 1) // m) * m


def base_ner_forward(ids, emb_table, *, dropout_rate=0.0, training=False,
                     seed=0, tokens_per_tile=256):
    """Embedding lookup + dropout: the BaseNERModel forward building block."""
    B, S = ids.shape
    V, D = emb_table.shape
    n = B * S

    tile = min(int(tokens_per_tile), _round_up(n, 8))     # multiple of 8 sublanes
    n_pad = _round_up(n, tile)
    ids_flat = jnp.pad(ids.reshape(n).astype(jnp.int32), (0, n_pad - n))
    ids_col = ids_flat.reshape(n_pad, 1)                   # (n_pad, 1): block = full last dim
    seed_arr = jnp.asarray([seed], dtype=jnp.int32)

    grid_spec = pltpu.PrefetchScalarGridSpec(
        num_scalar_prefetch=1,                             # seed lives in SMEM
        grid=(n_pad // tile,),
        in_specs=[
            pl.BlockSpec((tile, 1), lambda i, seed: (i, 0)),   # token-id tile
            pl.BlockSpec((V, D), lambda i, seed: (0, 0)),      # table resident in VMEM
        ],
        out_specs=pl.BlockSpec((tile, D), lambda i, seed: (i, 0)),
    )

    itemsize = jnp.dtype(emb_table.dtype).itemsize
    resident_bytes = 2 * (V * D * itemsize + tile * D * 4 + tile * 4)
    cp_kwargs = dict(dimension_semantics=("parallel",))
    if resident_bytes > (24 << 20):
        # Raise the scoped-VMEM limit but stay under v7x's 64 MiB physical VMEM.
        cp_kwargs["vmem_limit_bytes"] = min(resident_bytes + (8 << 20), 56 << 20)

    out = pl.pallas_call(
        functools.partial(_embed_dropout_kernel,
                          rate=float(dropout_rate), training=bool(training)),
        out_shape=jax.ShapeDtypeStruct((n_pad, D), emb_table.dtype),
        grid_spec=grid_spec,
        compiler_params=pltpu.CompilerParams(**cp_kwargs),
    )(seed_arr, ids_col, emb_table)

    return out[:n].reshape(B, S, D)


def init_params(key, vocab_size, embed_dim, pad_idx):
    # Deterministic init mirroring nn.Embedding: N(0, 1) weights, padding_idx row = 0.
    w = jax.random.normal(key, (vocab_size, embed_dim), dtype=jnp.float32)
    w = w.at[pad_idx].set(0.0)
    return w


if __name__ == "__main__":
    # Small "config": vocab=64, embed_dim=128 (lane-aligned), dropout=0.5, pad_idx=0.
    VOCAB, EMBED_DIM, PAD_IDX = 64, 128, 0
    B, S = 2, 8
    DROPOUT = 0.5

    key = jax.random.PRNGKey(0)
    k_emb, k_ids = jax.random.split(key)

    emb_table = init_params(k_emb, VOCAB, EMBED_DIM, PAD_IDX)
    ids = jax.random.randint(k_ids, (B, S), 0, VOCAB, dtype=jnp.int32)
    ids = ids.at[:, -2:].set(PAD_IDX)  # a few padding positions

    # Eval-mode forward (dropout = identity): must match a plain gather.
    out_eval = base_ner_forward(ids, emb_table, dropout_rate=DROPOUT, training=False)
    out_eval = jax.block_until_ready(out_eval)
    ref = jnp.take(emb_table, ids, axis=0)
    assert out_eval.shape == (B, S, EMBED_DIM)
    assert jnp.allclose(out_eval, ref, atol=1e-6), "embedding gather mismatch"
    assert jnp.allclose(out_eval[:, -2:, :], 0.0), "padding rows must be zero"

    # Training-mode forward (fused inverted dropout via counter-hash PRNG).
    out_train = base_ner_forward(
        ids, emb_table, dropout_rate=DROPOUT, training=True, seed=1234)
    out_train = jax.block_until_ready(out_train)
    assert out_train.shape == (B, S, EMBED_DIM)
    # surviving elements are exactly emb / (1 - p); dropped ones are exactly 0
    scaled = ref / (1.0 - DROPOUT)
    ok = jnp.logical_or(jnp.isclose(out_train, 0.0),
                        jnp.isclose(out_train, scaled, atol=1e-5))
    assert bool(jnp.all(ok)), "dropout output not in {0, x/(1-p)}"
    # mask must be non-degenerate (~rate dropped) on non-padding positions
    frac_dropped = float(jnp.mean(
        jnp.isclose(out_train[:, :-2, :], 0.0).astype(jnp.float32)))
    assert 0.25 < frac_dropped < 0.75, f"degenerate dropout mask ({frac_dropped})"

    print("KERNEL_OK")
</pallas_src>

<mosaic_0001>
module attributes {stable_mosaic.version = 11 : i64} {
  func.func @_embed_dropout_kernel(%arg0: i32, %arg1: memref<1xi32, #tpu.memory_space<smem>>, %arg2: memref<16x1xi32, #tpu.memory_space<vmem>>, %arg3: memref<64x128xf32, #tpu.memory_space<vmem>>, %arg4: memref<16x128xf32, #tpu.memory_space<vmem>>) attributes {dimension_semantics = [#tpu.dimension_semantics<parallel>], iteration_bounds = array<i64: 1>, scalar_prefetch = 1 : i64, scratch_operands = 0 : i64, tpu.core_type = #tpu.core_type<tc>, window_params = [{transform_indices = @transform_0, window_bounds = array<i64: 16, 1>}, {pipeline_mode = #tpu.pipeline_mode<synchronous>, transform_indices = @transform_1, window_bounds = array<i64: 64, 128>}, {transform_indices = @transform_2, window_bounds = array<i64: 16, 128>}]} {
    %c0 = arith.constant 0 : index
    %c0_0 = arith.constant 0 : index
    %0 = vector.load %arg2[%c0, %c0_0] : memref<16x1xi32, #tpu.memory_space<vmem>>, vector<16x1xi32>
    %c0_1 = arith.constant 0 : index
    %c0_2 = arith.constant 0 : index
    %1 = vector.load %arg3[%c0_1, %c0_2] : memref<64x128xf32, #tpu.memory_space<vmem>>, vector<64x128xf32>
    %2 = tpu.iota {dimensions = array<i32: 1>} : vector<16x64xi32>
    %3 = vector.broadcast %0 : vector<16x1xi32> to vector<16x64xi32>
    %4 = arith.cmpi eq, %3, %2 : vector<16x64xi32>
    %5 = arith.extui %4 : vector<16x64xi1> to vector<16x64xi32>
    %6 = arith.sitofp %5 : vector<16x64xi32> to vector<16x64xf32>
    %cst = arith.constant dense<0.000000e+00> : vector<16x128xf32>
    %7 = tpu.matmul %6, %1, %cst {dimension_numbers = #tpu.dot_dimension_numbers<[1], [0], [0], [1], [0, 0, 1, 1], [], []>} : vector<16x64xf32>, vector<64x128xf32>, vector<16x128xf32> -> vector<16x128xf32>
    %c0_3 = arith.constant 0 : index
    %c0_4 = arith.constant 0 : index
    %8 = vector.load %arg4[%c0_3, %c0_4] : memref<16x128xf32, #tpu.memory_space<vmem>>, vector<16x128xf32>
    tpu.vector_store %arg4[%c0_3, %c0_4], %7 {strides = array<i32>} : memref<16x128xf32, #tpu.memory_space<vmem>>, vector<16x128xf32>,
    return
  }
  func.func @transform_0(%arg0: i32, %arg1: memref<1xi32, #tpu.memory_space<smem>>) -> (i32, i32) {
    %c0_i32 = arith.constant 0 : i32
    %c0_i32_0 = arith.constant 0 : i32
    return %arg0, %c0_i32 : i32, i32
  }
  func.func @transform_1(%arg0: i32, %arg1: memref<1xi32, #tpu.memory_space<smem>>) -> (i32, i32) {
    %c0_i32 = arith.constant 0 : i32
    %c0_i32_0 = arith.constant 0 : i32
    %c0_i32_1 = arith.constant 0 : i32
    return %c0_i32, %c0_i32_0 : i32, i32
  }
  func.func @transform_2(%arg0: i32, %arg1: memref<1xi32, #tpu.memory_space<smem>>) -> (i32, i32) {
    %c0_i32 = arith.constant 0 : i32
    %c0_i32_0 = arith.constant 0 : i32
    return %arg0, %c0_i32 : i32, i32
  }
}

</mosaic_0001>

<llo_original>
// kernel: tpu_custom_call.1
$region0: #{tpu_custom_call.1}
  #allocation0 [shape = 'u32[]', space=smem, size = 0x4, offset = 0x4, fixed_abs, tag = 'smem constant byte address 0x4 - core index']
  #allocation1 [shape = 'u32[144,128]{1,0:T(1,128)}', space=vmem, size = 0x12000, scoped, tag = 'internal scratch']
  #allocation2 [shape = 's32[1]{0}', space=sflag, size = 0x4, scoped, tag = 'scoped memory for tpu_custom_call.1']
  #allocation3 [shape = 's32[1]{0:T(128)S(6)}', space=smem, size = 0x200, scoped, tag = 'prefetched SMEM operand 0']
  %s0 = inlined_call_operand.<no memory space> [shape: s32[1], index: 0, kind: input, shape index: {}]
  %s1 = inlined_call_operand.vmem [shape: s32[16,1], index: 1, kind: input, shape index: {}]
  %s2 = inlined_call_operand.hbm [shape: f32[64,128], index: 2, kind: input, shape index: {}]
  %s3 = inlined_call_operand.hbm [shape: f32[16,128], index: 3, kind: output, shape index: {}]
  %s4 = sld [smem:[#allocation0]]
  $region22: #{tpu_custom_call.1} parent=0
    _
  %s6 = ssub.s32 1, %s4
  %s7 = scalar_select 0, %s6, %s4
  %8 = sst [smem:[#allocation3]] %s0
  $region1: #{tpu_custom_call.1} parent=0
    #allocation4 [shape = 'u8[32768]{0}', space=vmem, size = 0x8000, scoped, tag = 'input window, operand 2, single buffered']
    #allocation5 [shape = 's32[1]{0}', space=sflag, size = 0x4, scoped, tag = 'scoped memory for tpu_custom_call.1']
    #allocation6 [shape = 's32[1]{0}', space=sflag, size = 0x4, scoped, tag = 'scoped memory for tpu_custom_call.1']
    #allocation7 [shape = 'u8[8192]{0}', space=vmem, size = 0x2000, scoped, tag = 'output window, operand 0, single buffered']
    %9 = vsyncpa [#allocation5], 0
    %10 = vsyncpa [#allocation6], 0
    // Predicated region
    $region2: #{tpu_custom_call.1} parent=1 // pred_check
      _
    $region3: #{tpu_custom_call.1} parent=1 // pred_check_branch
      %12 = sbr.rel (0) target = $region5
    $region4: #{tpu_custom_call.1} parent=1 // pred_region
      _
    $region5: #{tpu_custom_call.1} parent=1 // pred_fallthru
      _
    // Predicated region
    $region6: #{tpu_custom_call.1} parent=1 // pred_check
      _
    $region7: #{tpu_custom_call.1} parent=1 // pred_check_branch
      %14 = sbr.rel (0) target = $region9
    $region8: #{tpu_custom_call.1} parent=1 // pred_region
      %s16 = ssub.s32 1024, 1024
      %17 = vsyncadd [#allocation5], %s16
      %s18 = sshll.u32 [#allocation4], 4
      %s19 = int_to_ptr.vmem [resolvable:$true] %s18
      %24 = dma.hbm_to_vmem [thread:$0]  %s2, 1024, %s19, [#allocation5], 128, 128, 8
    $region9: #{tpu_custom_call.1} parent=1 // pred_fallthru
      _
    // Predicated region
    $region10: #{tpu_custom_call.1} parent=1 // pred_check
      _
    $region11: #{tpu_custom_call.1} parent=1 // pred_check_branch
      %26 = sbr.rel (0) target = $region13
    $region12: #{tpu_custom_call.1} parent=1 // pred_region
      %27 = dma.done [#allocation5], 1024
    $region13: #{tpu_custom_call.1} parent=1 // pred_fallthru
      _
    %v28 = vld [vmem:[%s1] sm:$0xff]
    %v29 = vld [vmem:[%s1 + $0x8] sm:$0xff]
    %v30 = vld [vmem:[#allocation4] sm:$0xff]
    %v31 = vld [vmem:[#allocation4 + $0x8] sm:$0xff]
    %v32 = vld [vmem:[#allocation4 + $0x10] sm:$0xff]
    %v33 = vld [vmem:[#allocation4 + $0x18] sm:$0xff]
    %v34 = vld [vmem:[#allocation4 + $0x20] sm:$0xff]
    %v35 = vld [vmem:[#allocation4 + $0x28] sm:$0xff]
    %v36 = vld [vmem:[#allocation4 + $0x30] sm:$0xff]
    %v37 = vld [vmem:[#allocation4 + $0x38] sm:$0xff]
    %v38 = vlaneseq
    %v39 = vand.u32 %v38, 127
    %40 = vset.pattern.permute.xlu0 0
    %41 = vperm.xlu0 %40, %v28
    %v42 = vpop.permute.xlu0 %41
    %43 = vset.pattern.permute.xlu0 0
    %44 = vperm.xlu0 %43, %v29
    %v45 = vpop.permute.xlu0 %44
    %vm46 = vcmp.eq.s32.totalorder %v42, %v39
    %vm47 = vcmp.eq.s32.totalorder %v45, %v39
    %v48 = vsel %vm46, 1, 0
    %v49 = vsel %vm47, 1, 0
    %v50 = vcvt.s32.f32 %v48
    %v51 = vcvt.s32.f32 %v49
    %vm52 = vcmask 523264
    %v54 = vsel %vm52, %v50, 0
    %v57 = vsel %vm52, %v51, 0
    %59 = vmatprep.subr.mxu0 0.0
    %60 = vmatpush1.msra.mxu0 %v30
    %61 = vmatprep.subr.mxu0 0.0
    %62 = vmatpush1.msra.mxu0 %v31
    %63 = vmatprep.subr.mxu0 0.0
    %64 = vmatpush1.msra.mxu0 %v32
    %65 = vmatprep.subr.mxu0 0.0
    %66 = vmatpush1.msra.mxu0 %v33
    %67 = vmatprep.subr.mxu0 0.0
    %68 = vmatpush1.msra.mxu0 %v34
    %69 = vmatprep.subr.mxu0 0.0
    %70 = vmatpush1.msra.mxu0 %v35
    %71 = vmatprep.subr.mxu0 0.0
    %72 = vmatpush1.msra.mxu0 %v36
    %73 = vmatprep.subr.mxu0 0.0
    %74 = vmatpush1.msra.mxu0 %v37
    %75 = vmatprep.subr.mxu0 0.0
    %76 = vmatpush1.msra.mxu0 0.0
    %77 = vmatprep.subr.mxu0 0.0
    %78 = vmatpush1.msra.mxu0 0.0
    %79 = vmatprep.subr.mxu0 0.0
    %80 = vmatpush1.msra.mxu0 0.0
    %81 = vmatprep.subr.mxu0 0.0
    %82 = vmatpush1.msra.mxu0 0.0
    %83 = vmatprep.subr.mxu0 0.0
    %84 = vmatpush1.msra.mxu0 0.0
    %85 = vmatprep.subr.mxu0 0.0
    %86 = vmatpush1.msra.mxu0 0.0
    %87 = vmatprep.subr.mxu0 0.0
    %88 = vmatpush1.msra.mxu0 0.0
    %89 = vmatprep.subr.mxu0 0.0
    %90 = vmatpush1.msra.mxu0 0.0
    %91 = vmatprep.subr.mxu0 0.0
    %92 = vmatpush1.msra.mxu0 0.0
    %93 = vmatprep.subr.mxu0 0.0
    %94 = vmatpush1.msra.mxu0 0.0
    %95 = vmatprep.subr.mxu0 0.0
    %96 = vmatpush1.msra.mxu0 0.0
    %97 = vmatprep.subr.mxu0 0.0
    %98 = vmatpush1.msra.mxu0 0.0
    %99 = vmatprep.subr.mxu0 0.0
    %100 = vmatpush1.msra.mxu0 0.0
    %101 = vmatprep.subr.mxu0 0.0
    %102 = vmatpush1.msra.mxu0 0.0
    %103 = vmatprep.subr.mxu0 0.0
    %104 = vmatpush1.msra.mxu0 0.0
    %105 = vmatprep.subr.mxu0 0.0
    %106 = vmatpush1.msra.mxu0 0.0
    %107 = vmatprep.subr.mxu0 0.0
    %108 = vmatpush1.msra.mxu0 0.0
    %109 = vmatprep.subr.mxu0 0.0
    %110 = vmatpush1.msra.mxu0 0.0
    %111 = vmatprep.subr.mxu0 0.0
    %112 = vmatpush1.msra.mxu0 0.0
    %113 = vmatprep.subr.mxu0 0.0
    %114 = vmatpush1.msra.mxu0 0.0
    %115 = vmatprep.subr.mxu0 0.0
    %116 = vmatpush1.msra.mxu0 0.0
    %117 = vmatprep.subr.mxu0 0.0
    %118 = vmatpush1.msra.mxu0 0.0
    %119 = vmatprep.subr.mxu0 0.0
    %120 = vmatpush1.msra.mxu0 0.0
    %121 = vmatprep.subr.mxu0 0.0
    %122 = vmatpush1.msra.mxu0 0.0
    %123 = vmatprep.mubr.f32.mxu0 0.0
    %124 = vmatmul.mubr.f32.gmra.mrb[0].mxu0 %v54
    %v125 = vpop.f32.mrb[0].mxu0
    %v126 = vadd.f32 0.0, %v125
    %v127 = vpop.f32.mrb[0].mxu0
    %128 = vmatprep.mubr.f32.mxu0 0.0
    %129 = vmatmul.mubr.f32.gmra.mrb[0].mxu0 %v57
    %v130 = vpop.f32.mrb[0].mxu0
    %v131 = vadd.f32 0.0, %v130
    %v132 = vpop.f32.mrb[0].mxu0
    %133 = vdwg.mxu0
    %134 = vst [vmem:[#allocation7] sm:$0xff] %v126
    %135 = vst [vmem:[#allocation7 + $0x8] sm:$0xff] %v131
    // Predicated region
    $region14: #{tpu_custom_call.1} parent=1 // pred_check
      _
    $region15: #{tpu_custom_call.1} parent=1 // pred_check_branch
      %137 = sbr.rel (0) target = $region17
    $region16: #{tpu_custom_call.1} parent=1 // pred_region
      %s139 = ssub.s32 256, 256
      %140 = vsyncadd [#allocation6], %s139
      %s141 = sshll.u32 [#allocation7], 4
      %s142 = int_to_ptr.vmem [resolvable:$true] %s141
      %147 = dma.vmem_to_hbm [thread:$0]  %s142, 256, %s3, [#allocation6], 128, 128, 8
    $region17: #{tpu_custom_call.1} parent=1 // pred_fallthru
      _
    // Predicated region
    $region18: #{tpu_custom_call.1} parent=1 // pred_check
      _
    $region19: #{tpu_custom_call.1} parent=1 // pred_check_branch
      %149 = sbr.rel (0) target = $region21
    $region20: #{tpu_custom_call.1} parent=1 // pred_region
      %150 = dma.done [#allocation6], 256
    $region21: #{tpu_custom_call.1} parent=1 // pred_fallthru
      _
    %151 = vsyncpa [#allocation5], 1
    %152 = vsyncpa [#allocation6], 1

</llo_original>
